<compile_context>
chip_gen: v7x
topology: tpu7x:2x2x1
jax: 0.10.0
libtpu: 0.0.40
codegen_flags: <defaults>
</compile_context>

<pallas_src>
import functools

import jax
import jax.numpy as jnp
from jax.experimental import pallas as pl
from jax.experimental.pallas import tpu as pltpu


def _vmem_limit_bytes():
    """Scoped-VMEM limit derived from the chip (v5e/v6e: 128 MiB, v7x: 64 MiB/TC)."""
    try:
        cap = int(pltpu.get_tpu_info().vmem_capacity_bytes)
    except Exception:
        cap = 0
    if cap <= 0:
        cap = 64 * 1024 * 1024          # v7x per-TC physical; safe everywhere
    # Leave headroom for compiler-internal scratch; cap at 96 MiB.
    return min(cap * 3 // 4, 96 * 1024 * 1024)


def _fused_tc(n, c, hw_pad, budget_bytes):
    """Largest channel tile for the single-pass kernel (None if tc=1 won't fit).

    tc is a leading block dim -> any divisor of C is legal (no (8,128) rule).
    Prefer >=4 grid steps (v7x megacore: 2 TCs each need >=2 pipelined steps),
    then >=2, then whatever fits.
    """
    divs = [d for d in range(1, c + 1) if c % d == 0]
    fitting = [d for d in divs if n * d * hw_pad * 4 <= budget_bytes]
    if not fitting:
        return None
    for min_steps in (4, 2, 1):
        cands = [d for d in fitting if c // d >= min_steps]
        if cands:
            return max(cands)
    return max(fitting)


def _two_phase_tiles(n, c, r, lane, budget_bytes):
    """(tc, tr) for the streaming kernels: biggest block <= budget, tr obeys (8,128)."""
    tr_cands = sorted({d for d in range(8, r + 1, 8) if r % d == 0} | {r})
    tc_cands = [d for d in range(1, c + 1) if c % d == 0]
    best = None
    for tc in tc_cands:
        for tr in tr_cands:
            nbytes = n * tc * tr * lane * 4
            if nbytes <= budget_bytes and (best is None or nbytes > best[2]):
                best = (tc, tr, nbytes)
    if best is None:                      # nothing fits: best-effort smallest block
        best = (1, tr_cands[0], 0)
    return best[0], best[1]


# ---------- single pass: stats + normalize + PReLU in one block visit ----------
def _bn_prelu_fused_kernel(x_ref, gamma_ref, beta_ref, alpha_ref, o_ref, *,
                           eps, inv_count):
    # x_ref / o_ref: (N, TC, R, 128); params: (TC, 1, 1)
    x = x_ref[...].astype(jnp.float32)
    # Reduce batch + sublane axes first (VPU vreg adds), lane axis (XLU) last.
    s = jnp.sum(x, axis=0)                           # (TC, R, 128)
    s = jnp.sum(s, axis=1, keepdims=True)            # (TC, 1, 128)
    s = jnp.sum(s, axis=2, keepdims=True)            # (TC, 1, 1)
    x2 = x * x
    sq = jnp.sum(x2, axis=0)
    sq = jnp.sum(sq, axis=1, keepdims=True)
    sq = jnp.sum(sq, axis=2, keepdims=True)          # (TC, 1, 1)
    mean = s * inv_count
    var = jnp.maximum(sq * inv_count - mean * mean, 0.0)
    inv_std = jax.lax.rsqrt(var + eps)
    scale = (gamma_ref[...] * inv_std)[None]         # (1, TC, 1, 1)
    bias = (beta_ref[...] - mean * gamma_ref[...] * inv_std)[None]
    alpha = alpha_ref[...][None]
    y = x * scale + bias
    o_ref[...] = jnp.where(y >= 0, y, alpha * y).astype(o_ref.dtype)


# ---------- two-phase fallback: streaming stats, then elementwise apply --------
def _stats_kernel(x_ref, sum_ref, sq_ref):
    r = pl.program_id(1)

    @pl.when(r == 0)
    def _():
        sum_ref[...] = jnp.zeros_like(sum_ref)
        sq_ref[...] = jnp.zeros_like(sq_ref)

    x = x_ref[...].astype(jnp.float32)               # (N, TC, TR, 128)
    s = jnp.sum(x, axis=0)                           # (TC, TR, 128)
    s = jnp.sum(s, axis=1, keepdims=True)            # (TC, 1, 128)
    s = jnp.sum(s, axis=2, keepdims=True)            # (TC, 1, 1)
    x2 = x * x
    sq = jnp.sum(x2, axis=0)
    sq = jnp.sum(sq, axis=1, keepdims=True)
    sq = jnp.sum(sq, axis=2, keepdims=True)
    # Output blocks are VMEM-resident across the reduction axis r
    # (index_map ignores r), so accumulate directly -- no scratch needed.
    sum_ref[...] += s
    sq_ref[...] += sq


def _apply_kernel(x_ref, gamma_ref, beta_ref, alpha_ref, sum_ref, sq_ref,
                  o_ref, *, eps, inv_count):
    # Fold the tiny per-channel stats -> scale/bias conversion into this kernel
    # (avoids an extra XLA dispatch + HBM round-trip of the stats).
    mean = sum_ref[...] * inv_count                  # (TC, 1, 1)
    var = jnp.maximum(sq_ref[...] * inv_count - mean * mean, 0.0)
    inv_std = jax.lax.rsqrt(var + eps)
    scale = (gamma_ref[...] * inv_std)[None]         # (1, TC, 1, 1)
    bias = (beta_ref[...] - mean * gamma_ref[...] * inv_std)[None]
    alpha = alpha_ref[...][None]
    x = x_ref[...].astype(jnp.float32)               # (N, TC, TR, 128)
    y = x * scale + bias
    o_ref[...] = jnp.where(y >= 0, y, alpha * y).astype(o_ref.dtype)


def bn_prelu(x_nchw, gamma, beta, alpha, eps=1e-3, block_budget_bytes=None):
    """BNPReLU forward. x: (N,C,H,W); gamma/beta/alpha: (C,). Returns (N,C,H,W)."""
    N, C, H, W = x_nchw.shape
    HW = H * W
    LANE = 128
    HW_pad = ((HW + LANE - 1) // LANE) * LANE
    R = HW_pad // LANE

    vmem_limit = _vmem_limit_bytes()
    if block_budget_bytes is None:
        # 2x double-buffered input + 2x output + f32 temporaries in the body.
        block_budget_bytes = max(vmem_limit // 8, 1024 * 1024)

    xf = x_nchw.reshape(N, C, HW)
    if HW_pad != HW:
        # Zero padding keeps sum / sum-of-squares exact; inv_count uses true HW.
        xf = jnp.pad(xf, ((0, 0), (0, 0), (0, HW_pad - HW)))
    x4 = xf.reshape(N, C, R, LANE)

    g = gamma.reshape(C, 1, 1).astype(jnp.float32)
    b = beta.reshape(C, 1, 1).astype(jnp.float32)
    a = alpha.reshape(C, 1, 1).astype(jnp.float32)
    inv_count = 1.0 / float(N * HW)

    tc = _fused_tc(N, C, HW_pad, block_budget_bytes)
    if tc is not None:
        # --- single pass: grid over channel tiles ("parallel" -> megacore) ---
        out4 = pl.pallas_call(
            functools.partial(_bn_prelu_fused_kernel, eps=eps,
                              inv_count=inv_count),
            out_shape=jax.ShapeDtypeStruct((N, C, R, LANE), x_nchw.dtype),
            grid=(C // tc,),
            in_specs=[
                pl.BlockSpec((N, tc, R, LANE), lambda c: (0, c, 0, 0)),
                pl.BlockSpec((tc, 1, 1), lambda c: (c, 0, 0)),
                pl.BlockSpec((tc, 1, 1), lambda c: (c, 0, 0)),
                pl.BlockSpec((tc, 1, 1), lambda c: (c, 0, 0)),
            ],
            out_specs=pl.BlockSpec((N, tc, R, LANE), lambda c: (0, c, 0, 0)),
            compiler_params=pltpu.CompilerParams(
                dimension_semantics=("parallel",),
                vmem_limit_bytes=vmem_limit),
        )(x4, g, b, a)
    else:
        # --- phase 1: per-channel sum / sum-of-squares over streamed tiles ---
        tc, tr = _two_phase_tiles(N, C, R, LANE, block_budget_bytes)
        num_c, num_r = C // tc, R // tr

        sum_c, sq_c = pl.pallas_call(
            _stats_kernel,
            out_shape=(jax.ShapeDtypeStruct((C, 1, 1), jnp.float32),
                       jax.ShapeDtypeStruct((C, 1, 1), jnp.float32)),
            grid=(num_c, num_r),
            in_specs=[pl.BlockSpec((N, tc, tr, LANE),
                                   lambda c, r: (0, c, r, 0))],
            out_specs=(pl.BlockSpec((tc, 1, 1), lambda c, r: (c, 0, 0)),
                       pl.BlockSpec((tc, 1, 1), lambda c, r: (c, 0, 0))),
            compiler_params=pltpu.CompilerParams(
                dimension_semantics=("parallel", "arbitrary"),
                vmem_limit_bytes=vmem_limit),
        )(x4)

        # --- phase 2: elementwise normalize + PReLU (stats folded in-kernel) ---
        out4 = pl.pallas_call(
            functools.partial(_apply_kernel, eps=eps, inv_count=inv_count),
            out_shape=jax.ShapeDtypeStruct((N, C, R, LANE), x_nchw.dtype),
            grid=(num_c, num_r),
            in_specs=[
                pl.BlockSpec((N, tc, tr, LANE), lambda c, r: (0, c, r, 0)),
                pl.BlockSpec((tc, 1, 1), lambda c, r: (c, 0, 0)),
                pl.BlockSpec((tc, 1, 1), lambda c, r: (c, 0, 0)),
                pl.BlockSpec((tc, 1, 1), lambda c, r: (c, 0, 0)),
                pl.BlockSpec((tc, 1, 1), lambda c, r: (c, 0, 0)),
                pl.BlockSpec((tc, 1, 1), lambda c, r: (c, 0, 0)),
            ],
            out_specs=pl.BlockSpec((N, tc, tr, LANE), lambda c, r: (0, c, r, 0)),
            compiler_params=pltpu.CompilerParams(
                dimension_semantics=("parallel", "parallel"),
                vmem_limit_bytes=vmem_limit),
        )(x4, g, b, a, sum_c, sq_c)

    out = out4.reshape(N, C, HW_pad)
    if HW_pad != HW:
        out = out[:, :, :HW]
    return out.reshape(N, C, H, W)


def _reference(x, gamma, beta, alpha, eps):
    mean = jnp.mean(x, axis=(0, 2, 3), keepdims=True)
    var = jnp.mean((x - mean) ** 2, axis=(0, 2, 3), keepdims=True)
    y = (x - mean) * jax.lax.rsqrt(var + eps)
    y = y * gamma[None, :, None, None] + beta[None, :, None, None]
    return jnp.where(y >= 0, y, alpha[None, :, None, None] * y)


if __name__ == "__main__":
    key = jax.random.PRNGKey(0)
    kx, kg, kb, kx2, kg2, kb2, kx3, kg3, kb3 = jax.random.split(key, 9)

    # Test 1: module-consistent small shape -> fused single-pass path.
    N, C, H, W = 2, 4, 16, 16
    x = jax.random.normal(kx, (N, C, H, W), dtype=jnp.float32)
    gamma = 1.0 + 0.1 * jax.random.normal(kg, (C,), dtype=jnp.float32)
    beta = 0.1 * jax.random.normal(kb, (C,), dtype=jnp.float32)
    alpha = jnp.full((C,), 0.25, dtype=jnp.float32)

    out = jax.block_until_ready(bn_prelu(x, gamma, beta, alpha))
    ref = _reference(x, gamma, beta, alpha, 1e-3)
    assert out.shape == (N, C, H, W)
    assert jnp.allclose(out, ref, rtol=1e-4, atol=1e-4), "fused path mismatch"

    # Test 2: tiny budget forces the tiled two-phase (stats + apply) path.
    N2, C2, H2, W2 = 2, 16, 128, 128
    x2 = jax.random.normal(kx2, (N2, C2, H2, W2), dtype=jnp.float32)
    gamma2 = 1.0 + 0.1 * jax.random.normal(kg2, (C2,), dtype=jnp.float32)
    beta2 = 0.1 * jax.random.normal(kb2, (C2,), dtype=jnp.float32)
    alpha2 = jnp.full((C2,), 0.25, dtype=jnp.float32)

    out2 = jax.block_until_ready(
        bn_prelu(x2, gamma2, beta2, alpha2, block_budget_bytes=32 * 1024))
    ref2 = _reference(x2, gamma2, beta2, alpha2, 1e-3)
    assert out2.shape == (N2, C2, H2, W2)
    assert jnp.allclose(out2, ref2, rtol=5e-4, atol=5e-4), "two-phase path mismatch"

    # Test 3: H*W not a multiple of 128 -> padded lane-dense layout.
    N3, C3, H3, W3 = 2, 3, 13, 13
    x3 = jax.random.normal(kx3, (N3, C3, H3, W3), dtype=jnp.float32)
    gamma3 = 1.0 + 0.1 * jax.random.normal(kg3, (C3,), dtype=jnp.float32)
    beta3 = 0.1 * jax.random.normal(kb3, (C3,), dtype=jnp.float32)
    alpha3 = jnp.full((C3,), 0.25, dtype=jnp.float32)

    out3 = jax.block_until_ready(bn_prelu(x3, gamma3, beta3, alpha3))
    ref3 = _reference(x3, gamma3, beta3, alpha3, 1e-3)
    assert out3.shape == (N3, C3, H3, W3)
    assert jnp.allclose(out3, ref3, rtol=1e-4, atol=1e-4), "padded path mismatch"

    print("KERNEL_OK")
</pallas_src>

<mosaic_0001>
module attributes {stable_mosaic.version = 11 : i64} {
  func.func @_bn_prelu_fused_kernel(%arg0: i32, %arg1: memref<2x1x2x128xf32, #tpu.memory_space<vmem>>, %arg2: memref<1x1x1xf32, #tpu.memory_space<vmem>>, %arg3: memref<1x1x1xf32, #tpu.memory_space<vmem>>, %arg4: memref<1x1x1xf32, #tpu.memory_space<vmem>>, %arg5: memref<2x1x2x128xf32, #tpu.memory_space<vmem>>) attributes {dimension_semantics = [#tpu.dimension_semantics<parallel>], iteration_bounds = array<i64: 4>, scalar_prefetch = 0 : i64, scratch_operands = 0 : i64, tpu.core_type = #tpu.core_type<tc>, window_params = [{transform_indices = @transform_0, window_bounds = array<i64: 2, 1, 2, 128>}, {transform_indices = @transform_1, window_bounds = array<i64: 1, 1, 1>}, {transform_indices = @transform_2, window_bounds = array<i64: 1, 1, 1>}, {transform_indices = @transform_3, window_bounds = array<i64: 1, 1, 1>}, {transform_indices = @transform_4, window_bounds = array<i64: 2, 1, 2, 128>}]} {
    %c0 = arith.constant 0 : index
    %c0_0 = arith.constant 0 : index
    %c0_1 = arith.constant 0 : index
    %c0_2 = arith.constant 0 : index
    %0 = vector.load %arg1[%c0, %c0_0, %c0_1, %c0_2] : memref<2x1x2x128xf32, #tpu.memory_space<vmem>>, vector<2x1x2x128xf32>
    %cst = arith.constant dense<0.000000e+00> : vector<1x2x128xf32>
    %1 = vector.multi_reduction <add>, %0, %cst [0] : vector<2x1x2x128xf32> to vector<1x2x128xf32>
    %cst_3 = arith.constant dense<0.000000e+00> : vector<1x128xf32>
    %2 = vector.multi_reduction <add>, %1, %cst_3 [1] : vector<1x2x128xf32> to vector<1x128xf32>
    %3 = vector.shape_cast %2 : vector<1x128xf32> to vector<1x1x128xf32>
    %cst_4 = arith.constant dense<0.000000e+00> : vector<1x1xf32>
    %4 = vector.multi_reduction <add>, %3, %cst_4 [2] : vector<1x1x128xf32> to vector<1x1xf32>
    %5 = vector.shape_cast %4 : vector<1x1xf32> to vector<1x1x1xf32>
    %6 = arith.mulf %0, %0 : vector<2x1x2x128xf32>
    %cst_5 = arith.constant dense<0.000000e+00> : vector<1x2x128xf32>
    %7 = vector.multi_reduction <add>, %6, %cst_5 [0] : vector<2x1x2x128xf32> to vector<1x2x128xf32>
    %cst_6 = arith.constant dense<0.000000e+00> : vector<1x128xf32>
    %8 = vector.multi_reduction <add>, %7, %cst_6 [1] : vector<1x2x128xf32> to vector<1x128xf32>
    %9 = vector.shape_cast %8 : vector<1x128xf32> to vector<1x1x128xf32>
    %cst_7 = arith.constant dense<0.000000e+00> : vector<1x1xf32>
    %10 = vector.multi_reduction <add>, %9, %cst_7 [2] : vector<1x1x128xf32> to vector<1x1xf32>
    %11 = vector.shape_cast %10 : vector<1x1xf32> to vector<1x1x1xf32>
    %cst_8 = arith.constant 0.001953125 : f32
    %12 = vector.broadcast %cst_8 : f32 to vector<1x1x1xf32>
    %13 = arith.mulf %5, %12 : vector<1x1x1xf32>
    %cst_9 = arith.constant 0.001953125 : f32
    %14 = vector.broadcast %cst_9 : f32 to vector<1x1x1xf32>
    %15 = arith.mulf %11, %14 : vector<1x1x1xf32>
    %16 = arith.mulf %13, %13 : vector<1x1x1xf32>
    %17 = arith.subf %15, %16 : vector<1x1x1xf32>
    %cst_10 = arith.constant 0.000000e+00 : f32
    %18 = vector.broadcast %cst_10 : f32 to vector<1x1x1xf32>
    %19 = arith.maximumf %17, %18 : vector<1x1x1xf32>
    %cst_11 = arith.constant 1.000000e-03 : f32
    %20 = vector.broadcast %cst_11 : f32 to vector<1x1x1xf32>
    %21 = arith.addf %19, %20 : vector<1x1x1xf32>
    %22 = math.rsqrt %21 : vector<1x1x1xf32>
    %c0_12 = arith.constant 0 : index
    %c0_13 = arith.constant 0 : index
    %c0_14 = arith.constant 0 : index
    %23 = vector.load %arg2[%c0_12, %c0_13, %c0_14] : memref<1x1x1xf32, #tpu.memory_space<vmem>>, vector<1x1x1xf32>
    %24 = arith.mulf %23, %22 : vector<1x1x1xf32>
    %25 = vector.shape_cast %24 : vector<1x1x1xf32> to vector<1x1x1x1xf32>
    %c0_15 = arith.constant 0 : index
    %c0_16 = arith.constant 0 : index
    %c0_17 = arith.constant 0 : index
    %26 = vector.load %arg3[%c0_15, %c0_16, %c0_17] : memref<1x1x1xf32, #tpu.memory_space<vmem>>, vector<1x1x1xf32>
    %c0_18 = arith.constant 0 : index
    %c0_19 = arith.constant 0 : index
    %c0_20 = arith.constant 0 : index
    %27 = vector.load %arg2[%c0_18, %c0_19, %c0_20] : memref<1x1x1xf32, #tpu.memory_space<vmem>>, vector<1x1x1xf32>
    %28 = arith.mulf %13, %27 : vector<1x1x1xf32>
    %29 = arith.mulf %28, %22 : vector<1x1x1xf32>
    %30 = arith.subf %26, %29 : vector<1x1x1xf32>
    %31 = vector.shape_cast %30 : vector<1x1x1xf32> to vector<1x1x1x1xf32>
    %c0_21 = arith.constant 0 : index
    %c0_22 = arith.constant 0 : index
    %c0_23 = arith.constant 0 : index
    %32 = vector.load %arg4[%c0_21, %c0_22, %c0_23] : memref<1x1x1xf32, #tpu.memory_space<vmem>>, vector<1x1x1xf32>
    %33 = vector.shape_cast %32 : vector<1x1x1xf32> to vector<1x1x1x1xf32>
    %34 = vector.broadcast %25 : vector<1x1x1x1xf32> to vector<2x1x2x128xf32>
    %35 = arith.mulf %0, %34 : vector<2x1x2x128xf32>
    %36 = vector.broadcast %31 : vector<1x1x1x1xf32> to vector<2x1x2x128xf32>
    %37 = arith.addf %35, %36 : vector<2x1x2x128xf32>
    %cst_24 = arith.constant 0.000000e+00 : f32
    %38 = vector.broadcast %cst_24 : f32 to vector<2x1x2x128xf32>
    %39 = arith.cmpf oge, %37, %38 : vector<2x1x2x128xf32>
    %40 = vector.broadcast %33 : vector<1x1x1x1xf32> to vector<2x1x2x128xf32>
    %41 = arith.mulf %40, %37 : vector<2x1x2x128xf32>
    %42 = arith.select %39, %37, %41 : vector<2x1x2x128xi1>, vector<2x1x2x128xf32>
    %c0_25 = arith.constant 0 : index
    %c0_26 = arith.constant 0 : index
    %c0_27 = arith.constant 0 : index
    %c0_28 = arith.constant 0 : index
    %43 = vector.load %arg5[%c0_25, %c0_26, %c0_27, %c0_28] : memref<2x1x2x128xf32, #tpu.memory_space<vmem>>, vector<2x1x2x128xf32>
    tpu.vector_store %arg5[%c0_25, %c0_26, %c0_27, %c0_28], %42 {strides = array<i32>} : memref<2x1x2x128xf32, #tpu.memory_space<vmem>>, vector<2x1x2x128xf32>,
    return
  }
  func.func @transform_0(%arg0: i32) -> (i32, i32, i32, i32) {
    %c0_i32 = arith.constant 0 : i32
    %c0_i32_0 = arith.constant 0 : i32
    %c0_i32_1 = arith.constant 0 : i32
    %c0_i32_2 = arith.constant 0 : i32
    return %c0_i32, %arg0, %c0_i32_0, %c0_i32_1 : i32, i32, i32, i32
  }
  func.func @transform_1(%arg0: i32) -> (i32, i32, i32) {
    %c0_i32 = arith.constant 0 : i32
    %c0_i32_0 = arith.constant 0 : i32
    %c0_i32_1 = arith.constant 0 : i32
    return %arg0, %c0_i32, %c0_i32_0 : i32, i32, i32
  }
  func.func @transform_2(%arg0: i32) -> (i32, i32, i32) {
    %c0_i32 = arith.constant 0 : i32
    %c0_i32_0 = arith.constant 0 : i32
    %c0_i32_1 = arith.constant 0 : i32
    return %arg0, %c0_i32, %c0_i32_0 : i32, i32, i32
  }
  func.func @transform_3(%arg0: i32) -> (i32, i32, i32) {
    %c0_i32 = arith.constant 0 : i32
    %c0_i32_0 = arith.constant 0 : i32
    %c0_i32_1 = arith.constant 0 : i32
    return %arg0, %c0_i32, %c0_i32_0 : i32, i32, i32
  }
  func.func @transform_4(%arg0: i32) -> (i32, i32, i32, i32) {
    %c0_i32 = arith.constant 0 : i32
    %c0_i32_0 = arith.constant 0 : i32
    %c0_i32_1 = arith.constant 0 : i32
    %c0_i32_2 = arith.constant 0 : i32
    return %c0_i32, %arg0, %c0_i32_0, %c0_i32_1 : i32, i32, i32, i32
  }
}

</mosaic_0001>

<llo_original>
// kernel: tpu_custom_call.1
$region0: #{tpu_custom_call.1}
  #allocation0 [shape = 'u32[]', space=smem, size = 0x4, offset = 0x4, fixed_abs, tag = 'smem constant byte address 0x4 - core index']
  #allocation1 [shape = 'u32[144,128]{1,0:T(1,128)}', space=vmem, size = 0x12000, scoped, tag = 'internal scratch']
  %s0 = inlined_call_operand.hbm [shape: f32[2,4,2,128], index: 0, kind: input, shape index: {}]
  %s1 = inlined_call_operand.vmem [shape: f32[4,1,1], index: 1, kind: input, shape index: {}]
  %s2 = inlined_call_operand.vmem [shape: f32[4,1,1], index: 2, kind: input, shape index: {}]
  %s3 = inlined_call_operand.vmem [shape: f32[4,1,1], index: 3, kind: input, shape index: {}]
  %s4 = inlined_call_operand.hbm [shape: f32[2,4,2,128], index: 4, kind: output, shape index: {}]
  %s5 = sld [smem:[#allocation0]]
  $region53: #{tpu_custom_call.1} parent=0
    _
  %s7 = ssub.s32 1, %s5
  %s8 = scalar_select 0, %s7, %s5
  $region1: #{tpu_custom_call.1} parent=0
    #allocation2 [shape = 'u8[4096]{0}', space=vmem, size = 0x1000, scoped, tag = 'input window, operand 0']
    #allocation3 [shape = 's32[2]{0}', space=sflag, size = 0x8, scoped, tag = 'scoped memory for tpu_custom_call.1']
    #allocation4 [shape = 's32[2]{0}', space=sflag, size = 0x8, scoped, tag = 'scoped memory for tpu_custom_call.1']
    #allocation5 [shape = 'u8[4096]{0}', space=vmem, size = 0x1000, scoped, tag = 'output window, operand 0']
    %9 = vsyncpa [#allocation3], 0
    %s10 = scalar_lea.sflag [#allocation3], 1
    %11 = vsyncpa %s10, 0
    %12 = vsyncpa [#allocation4], 0
    %s13 = scalar_lea.sflag [#allocation4], 1
    %14 = vsyncpa %s13, 0
    loop: start=0, step=1, limit=6
    $region2: #{tpu_custom_call.1} parent=1 // loop_pre_header
      _
    $region3: #{tpu_custom_call.1} parent=1 // loop_header
      %s16 = sphi 0, %s20
      %p17 = scmp.ge.s32.totalorder %s16, 6
      %s26 = sphi 0, %s28
      %s29 = sphi 0, %s26
      %s30 = sphi 0, %s29
      %s46 = sphi 0, %s30
      %s52 = sphi 0, %s54
      %s55 = sphi 0, %s52
      %s56 = sphi 0, %s55
      %s72 = sphi 0, %s56
      %s78 = sphi 0, %s80
      %s81 = sphi 0, %s78
      %s82 = sphi 0, %s81
      %s98 = sphi 0, %s82
      %s104 = sphi 0, %s106
      %s107 = sphi 0, %s104
      %s108 = sphi 0, %s107
      %s124 = sphi 0, %s108
      %s130 = sphi 0, %s132
      %s133 = sphi 0, %s130
      %s134 = sphi 0, %s133
      %s150 = sphi 0, %s134
    $region4: #{tpu_custom_call.1} parent=1 // loop_header_branch
      %19 = sbr.rel (%p17) target = $region8
    $region5: #{tpu_custom_call.1} parent=1 // loop_body
      %s21 = ssub.s32 %s16, 1
      %s22 = ssub.s32 %s16, 2
      %s23 = sadd.s32 %s16, 1
      %s24 = ssub.s32 %s16, %s23
      %p25 = scmp.eq.s32.totalorder %s24, 0
      %s27 = sadd.s32 %s26, 1
      %s28 = scalar_select %p25, %s26, %s27
      %p31 = pneg %p25
      %p32 = scmp.eq.s32.totalorder %s16, 3
      %p33 = por %p31, %p32
      %p34 = scmp.ne.s32.totalorder %s26, %s29
      %p35 = scmp.eq.s32.totalorder %s16, 0
      %p36 = por %p34, %p35
      %p37 = scmp.ne.s32.totalorder %s26, %s29
      %p38 = scmp.eq.s32.totalorder %s21, 3
      %p39 = por %p37, %p38
      %p40 = scmp.ne.s32.totalorder %s29, %s30
      %p41 = scmp.eq.s32.totalorder %s21, 0
      %p42 = por %p40, %p41
      %p43 = scmp.ne.s32.totalorder %s29, %s30
      %p44 = scmp.eq.s32.totalorder %s22, 3
      %p45 = por %p43, %p44
      %p47 = scmp.ne.s32.totalorder %s30, %s46
      %p48 = scmp.eq.s32.totalorder %s22, 0
      %p49 = por %p47, %p48
      %s50 = ssub.s32 %s16, %s23
      %p51 = scmp.eq.s32.totalorder %s50, 0
      %s53 = sadd.s32 %s52, 1
      %s54 = scalar_select %p51, %s52, %s53
      %p57 = pneg %p51
      %p58 = scmp.eq.s32.totalorder %s16, 3
      %p59 = por %p57, %p58
      %p60 = scmp.ne.s32.totalorder %s52, %s55
      %p61 = scmp.eq.s32.totalorder %s16, 0
      %p62 = por %p60, %p61
      %p63 = scmp.ne.s32.totalorder %s52, %s55
      %p64 = scmp.eq.s32.totalorder %s21, 3
      %p65 = por %p63, %p64
      %p66 = scmp.ne.s32.totalorder %s55, %s56
      %p67 = scmp.eq.s32.totalorder %s21, 0
      %p68 = por %p66, %p67
      %p69 = scmp.ne.s32.totalorder %s55, %s56
      %p70 = scmp.eq.s32.totalorder %s22, 3
      %p71 = por %p69, %p70
      %p73 = scmp.ne.s32.totalorder %s56, %s72
      %p74 = scmp.eq.s32.totalorder %s22, 0
      %p75 = por %p73, %p74
      %s76 = ssub.s32 %s16, %s23
      %p77 = scmp.eq.s32.totalorder %s76, 0
      %s79 = sadd.s32 %s78, 1
      %s80 = scalar_select %p77, %s78, %s79
      %p83 = pneg %p77
      %p84 = scmp.eq.s32.totalorder %s16, 3
      %p85 = por %p83, %p84
      %p86 = scmp.ne.s32.totalorder %s78, %s81
      %p87 = scmp.eq.s32.totalorder %s16, 0
      %p88 = por %p86, %p87
      %p89 = scmp.ne.s32.totalorder %s78, %s81
      %p90 = scmp.eq.s32.totalorder %s21, 3
      %p91 = por %p89, %p90
      %p92 = scmp.ne.s32.totalorder %s81, %s82
      %p93 = scmp.eq.s32.totalorder %s21, 0
      %p94 = por %p92, %p93
      %p95 = scmp.ne.s32.totalorder %s81, %s82
      %p96 = scmp.eq.s32.totalorder %s22, 3
      %p97 = por %p95, %p96
      %p99 = scmp.ne.s32.totalorder %s82, %s98
      %p100 = scmp.eq.s32.totalorder %s22, 0
      %p101 = por %p99, %p100
      %s102 = ssub.s32 %s16, %s23
      %p103 = scmp.eq.s32.totalorder %s102, 0
      %s105 = sadd.s32 %s104, 1
      %s106 = scalar_select %p103, %s104, %s105
      %p109 = pneg %p103
      %p110 = scmp.eq.s32.totalorder %s16, 3
      %p111 = por %p109, %p110
      %p112 = scmp.ne.s32.totalorder %s104, %s107
      %p113 = scmp.eq.s32.totalorder %s16, 0
      %p114 = por %p112, %p113
      %p115 = scmp.ne.s32.totalorder %s104, %s107
      %p116 = scmp.eq.s32.totalorder %s21, 3
      %p117 = por %p115, %p116
      %p118 = scmp.ne.s32.totalorder %s107, %s108
      %p119 = scmp.eq.s32.totalorder %s21, 0
      %p120 = por %p118, %p119
      %p121 = scmp.ne.s32.totalorder %s107, %s108
      %p122 = scmp.eq.s32.totalorder %s22, 3
      %p123 = por %p121, %p122
      %p125 = scmp.ne.s32.totalorder %s108, %s124
      %p126 = scmp.eq.s32.totalorder %s22, 0
      %p127 = por %p125, %p126
      %s128 = ssub.s32 %s16, %s23
      %p129 = scmp.eq.s32.totalorder %s128, 0
      %s131 = sadd.s32 %s130, 1
      %s132 = scalar_select %p129, %s130, %s131
      %p135 = pneg %p129
      %p136 = scmp.eq.s32.totalorder %s16, 3
      %p137 = por %p135, %p136
      %p138 = scmp.ne.s32.totalorder %s130, %s133
      %p139 = scmp.eq.s32.totalorder %s16, 0
      %p140 = por %p138, %p139
      %p141 = scmp.ne.s32.totalorder %s130, %s133
      %p142 = scmp.eq.s32.totalorder %s21, 3
      %p143 = por %p141, %p142
      %p144 = scmp.ne.s32.totalorder %s133, %s134
      %p145 = scmp.eq.s32.totalorder %s21, 0
      %p146 = por %p144, %p145
      %p147 = scmp.ne.s32.totalorder %s133, %s134
      %p148 = scmp.eq.s32.totalorder %s22, 3
      %p149 = por %p147, %p148
      %p151 = scmp.ne.s32.totalorder %s134, %s150
      %p152 = scmp.eq.s32.totalorder %s22, 0
      %p153 = por %p151, %p152
      %p154 = scmp.le.s32.totalorder 1, %s16
      %p155 = scmp.lt.s32.totalorder %s16, 5
      %p156 = pnand %p154, %p155
      %p157 = pneg %p156
      // Predicated region
      $region9: #{tpu_custom_call.1} parent=5 // pred_check
        _
      $region10: #{tpu_custom_call.1} parent=5 // pred_check_branch
        %159 = sbr.rel (%p156) target = $region12
      $region11: #{tpu_custom_call.1} parent=5 // pred_region
        %s160 = ssub.s32 %s16, 1
      $region12: #{tpu_custom_call.1} parent=5 // pred_fallthru
        _
      %p161 = scmp.lt.s32.totalorder %s16, 4
      // Predicated region
      $region13: #{tpu_custom_call.1} parent=5 // pred_check
        %p162 = pneg %p161
      $region14: #{tpu_custom_call.1} parent=5 // pred_check_branch
        %164 = sbr.rel (%p162) target = $region16
      $region15: #{tpu_custom_call.1} parent=5 // pred_region
        // Predicated region
        $region17: #{tpu_custom_call.1} parent=15 // pred_check
          %p165 = pneg %p36
        $region18: #{tpu_custom_call.1} parent=15 // pred_check_branch
          %167 = sbr.rel (%p165) target = $region20
        $region19: #{tpu_custom_call.1} parent=15 // pred_region
          %s168 = sand.u32 %s26, 1
          %s169 = scalar_lea.sflag [#allocation3], %s168
          %s170 = sand.u32 %s26, 1
          %s171 = smul.addr %s170, 4
          %s172 = scalar_lea.vmem [#allocation2], %s171
          %s174 = ssub.s32 64, 64
          %175 = vsyncadd %s169, %s174
          %s176 = smul.addr %s16, 32
          %s177 = scalar_lea.hbm %s0, %s176
          %s178 = sshll.u32 %s172, 4
          %s179 = int_to_ptr.vmem [resolvable:$true] %s178
          %184 = dma.hbm_to_vmem [thread:$0]  %s177, 64, %s179, %s169, 128, 32, 2
        $region20: #{tpu_custom_call.1} parent=15 // pred_fallthru
          _
        // Predicated region
        $region21: #{tpu_custom_call.1} parent=15 // pred_check
          %p185 = pneg %p62
        $region22: #{tpu_custom_call.1} parent=15 // pred_check_branch
          %187 = sbr.rel (%p185) target = $region24
        $region23: #{tpu_custom_call.1} parent=15 // pred_region
          %p188 = scmp.lt.s32.totalorder %s16, 3
          %s189 = scalar_select %p188, %s16, 3
          %s190 = scalar_lea.vmem %s1, %s189
        $region24: #{tpu_custom_call.1} parent=15 // pred_fallthru
          _
        // Predicated region
        $region25: #{tpu_custom_call.1} parent=15 // pred_check
          %p191 = pneg %p88
        $region26: #{tpu_custom_call.1} parent=15 // pred_check_branch
          %193 = sbr.rel (%p191) target = $region28
        $region27: #{tpu_custom_call.1} parent=15 // pred_region
          %p194 = scmp.lt.s32.totalorder %s16, 3
          %s195 = scalar_select %p194, %s16, 3
          %s196 = scalar_lea.vmem %s2, %s195
        $region28: #{tpu_custom_call.1} parent=15 // pred_fallthru
          _
        // Predicated region
        $region29: #{tpu_custom_call.1} parent=15 // pred_check
          %p197 = pneg %p114
        $region30: #{tpu_custom_call.1} parent=15 // pred_check_branch
          %199 = sbr.rel (%p197) target = $region32
        $region31: #{tpu_custom_call.1} parent=15 // pred_region
          %p200 = scmp.lt.s32.totalorder %s16, 3
          %s201 = scalar_select %p200, %s16, 3
          %s202 = scalar_lea.vmem %s3, %s201
        $region32: #{tpu_custom_call.1} parent=15 // pred_fallthru
          _
      $region16: #{tpu_custom_call.1} parent=5 // pred_fallthru
        _
      %p203 = scmp.le.s32.totalorder 1, %s16
      %p204 = scmp.lt.s32.totalorder %s16, 5
      %p205 = pnand %p203, %p204
      %p206 = pneg %p205
      // Predicated region
      $region33: #{tpu_custom_call.1} parent=5 // pred_check
        _
      $region34: #{tpu_custom_call.1} parent=5 // pred_check_branch
        %208 = sbr.rel (%p205) target = $region36
      $region35: #{tpu_custom_call.1} parent=5 // pred_region
        %s209 = ssub.s32 %s16, 1
        %s210 = sand.u32 %s29, 1
        %s211 = scalar_lea.sflag [#allocation3], %s210
        %s212 = sand.u32 %s29, 1
        %s213 = smul.addr %s212, 4
        %s214 = scalar_lea.vmem [#allocation2], %s213
        // Predicated region
        $region37: #{tpu_custom_call.1} parent=35 // pred_check
          %p215 = pneg %p42
        $region38: #{tpu_custom_call.1} parent=35 // pred_check_branch
          %217 = sbr.rel (%p215) target = $region40
        $region39: #{tpu_custom_call.1} parent=35 // pred_region
          %218 = dma.done %s211, 64
        $region40: #{tpu_custom_call.1} parent=35 // pred_fallthru
          _
        %s219 = sand.u32 %s29, 1
        %s220 = scalar_lea.sflag [#allocation3], %s219
        %s221 = sand.u32 %s29, 1
        %s222 = smul.addr %s221, 4
        %s223 = scalar_lea.vmem [#allocation2], %s222
        %p224 = pneg %p42
        %p225 = pneg %p39
        %p226 = scmp.lt.s32.totalorder %s21, 3
        %s227 = scalar_select %p226, %s21, 3
        %s228 = scalar_lea.vmem %s1, %s227
        %p229 = pneg %p68
        %p230 = pneg %p65
        %p231 = scmp.lt.s32.totalorder %s21, 3
        %s232 = scalar_select %p231, %s21, 3
        %s233 = scalar_lea.vmem %s2, %s232
        %p234 = pneg %p94
        %p235 = pneg %p91
        %p236 = scmp.lt.s32.totalorder %s21, 3
        %s237 = scalar_select %p236, %s21, 3
        %s238 = scalar_lea.vmem %s3, %s237
        %p239 = pneg %p120
        %p240 = pneg %p117
        %p241 = pneg %p146
        %p242 = pneg %p143
        %s243 = sand.u32 %s133, 1
        %s244 = scalar_lea.sflag [#allocation4], %s243
        %s245 = sand.u32 %s133, 1
        %s246 = smul.addr %s245, 4
        %s247 = scalar_lea.vmem [#allocation5], %s246
        %p248 = scmp.lt.s32.totalorder %s21, 3
        %s249 = scalar_select %p248, %s21, 3
        %s250 = scalar_lea.vmem %s1, %s249
        %p251 = scmp.lt.s32.totalorder %s21, 3
        %s252 = scalar_select %p251, %s21, 3
        %s253 = scalar_lea.vmem %s2, %s252
        %p254 = scmp.lt.s32.totalorder %s21, 3
        %s255 = scalar_select %p254, %s21, 3
        %s256 = scalar_lea.vmem %s3, %s255
        %v257 = vld [vmem:[%s214] sm:$0x3]
        %v258 = vld [vmem:[%s214 + $0x2] sm:$0x3]
        %vm259 = vcmask 1041408
        %v260 = vsel %vm259, %v257, 0.0
        %v261 = vsel %vm259, %v258, 0.0
        %v262 = vadd.f32 %v260, %v261
        %v263 = vsel %vm259, %v262, 0.0
        %v264 = vrot.slane %v263, 4
        %v265 = vadd.f32 %v263, %v264
        %v266 = vrot.slane %v265, 2
        %v267 = vadd.f32 %v265, %v266
        %v268 = vrot.slane %v267, 1
        %v269 = vadd.f32 %v267, %v268
        %270 = vadd.xlane.f32.xlu0 %v269
        %v271 = vpop.xlane.xlu0 %270
        %v272 = vmul.f32 %v257, %v257
        %v273 = vmul.f32 %v258, %v258
        %v274 = vsel %vm259, %v272, 0.0
        %v275 = vsel %vm259, %v273, 0.0
        %v276 = vadd.f32 %v274, %v275
        %v277 = vsel %vm259, %v276, 0.0
        %v278 = vrot.slane %v277, 4
        %v279 = vadd.f32 %v277, %v278
        %v280 = vrot.slane %v279, 2
        %v281 = vadd.f32 %v279, %v280
        %v282 = vrot.slane %v281, 1
        %v283 = vadd.f32 %v281, %v282
        %284 = vadd.xlane.f32.xlu0 %v283
        %v285 = vpop.xlane.xlu0 %284
        %v286 = vmul.f32 %v271, 0.001953125
        %v287 = vmul.f32 %v285, 0.001953125
        %v288 = vmul.f32 %v286, %v286
        %v289 = vsub.f32 %v287, %v288
        %v290 = vmax.f32 %v289, 0.0
        %v291 = vadd.f32 %v290, 0.001
        %v292 = vrsqrt.pop %v291
        %v293 = vld [vmem:[%s250] sm:$0x1]
        %v294 = vmul.f32 %v293, %v292
        %v295 = vld [vmem:[%s253] sm:$0x1]
        %v296 = vmul.f32 %v286, %v293
        %v297 = vmul.f32 %v296, %v292
        %v298 = vsub.f32 %v295, %v297
        %v299 = vld [vmem:[%s256] sm:$0x1]
        %v301 = vlaneseq
        %v302 = vshrl.u32 %v301, 7
        %v303 = vsub.s32 0, %v302
        %v304 = vrot.slane %v294, %v303
        %305 = vset.pattern.permute.xlu0 0
        %306 = vperm.xlu0 %305, %v304
        %v307 = vpop.permute.xlu0 %306
        %v309 = vmul.f32 %v257, %v307
        %v310 = vmul.f32 %v258, %v307
        %v312 = vlaneseq
        %v313 = vshrl.u32 %v312, 7
        %v314 = vsub.s32 0, %v313
        %v315 = vrot.slane %v298, %v314
        %316 = vset.pattern.permute.xlu0 0
        %317 = vperm.xlu0 %316, %v315
        %v318 = vpop.permute.xlu0 %317
        %v320 = vadd.f32 %v309, %v318
        %v321 = vadd.f32 %v310, %v318
        %vm322 = vcmp.ge.f32.partialorder %v320, 0.0
        %vm323 = vcmp.ge.f32.partialorder %v321, 0.0
        %v325 = vlaneseq
        %v326 = vshrl.u32 %v325, 7
        %v327 = vsub.s32 0, %v326
        %v328 = vrot.slane %v299, %v327
        %329 = vset.pattern.permute.xlu0 0
        %330 = vperm.xlu0 %329, %v328
        %v331 = vpop.permute.xlu0 %330
        %v333 = vmul.f32 %v331, %v320
        %v334 = vmul.f32 %v331, %v321
        %v335 = vsel %vm322, %v320, %v333
        %v336 = vsel %vm323, %v321, %v334
        %337 = vst [vmem:[%s247] sm:$0x3] %v335
        %338 = vst [vmem:[%s247 + $0x2] sm:$0x3] %v336
        %s339 = sand.u32 %s133, 1
        %s340 = scalar_lea.sflag [#allocation4], %s339
        %s341 = sand.u32 %s133, 1
        %s342 = smul.addr %s341, 4
        %s343 = scalar_lea.vmem [#allocation5], %s342
        // Predicated region
        $region41: #{tpu_custom_call.1} parent=35 // pred_check
          %p344 = pneg %p143
        $region42: #{tpu_custom_call.1} parent=35 // pred_check_branch
          %346 = sbr.rel (%p344) target = $region44
        $region43: #{tpu_custom_call.1} parent=35 // pred_region
          %s348 = ssub.s32 64, 64
          %349 = vsyncadd %s340, %s348
          %s350 = smul.addr %s21, 32
          %s351 = scalar_lea.hbm %s4, %s350
          %s352 = sshll.u32 %s343, 4
          %s353 = int_to_ptr.vmem [resolvable:$true] %s352
          %358 = dma.vmem_to_hbm [thread:$0]  %s353, 64, %s351, %s340, 32, 128, 2
        $region44: #{tpu_custom_call.1} parent=35 // pred_fallthru
          _
      $region36: #{tpu_custom_call.1} parent=5 // pred_fallthru
        _
      %p359 = scmp.le.s32.totalorder 2, %s16
      // Predicated region
      $region45: #{tpu_custom_call.1} parent=5 // pred_check
        %p360 = pneg %p359
      $region46: #{tpu_custom_call.1} parent=5 // pred_check_branch
        %362 = sbr.rel (%p360) target = $region48
      $region47: #{tpu_custom_call.1} parent=5 // pred_region
        %s363 = ssub.s32 %s16, 2
        // Predicated region
        $region49: #{tpu_custom_call.1} parent=47 // pred_check
          %p364 = pneg %p149
        $region50: #{tpu_custom_call.1} parent=47 // pred_check_branch
          %366 = sbr.rel (%p364) target = $region52
        $region51: #{tpu_custom_call.1} parent=47 // pred_region
          %s367 = sand.u32 %s134, 1
          %s368 = scalar_lea.sflag [#allocation4], %s367
          %s369 = sand.u32 %s134, 1
          %s370 = smul.addr %s369, 4
          %s371 = scalar_lea.vmem [#allocation5], %s370
          %372 = dma.done %s368, 64
        $region52: #{tpu_custom_call.1} parent=47 // pred_fallthru
          _
      $region48: #{tpu_custom_call.1} parent=5 // pred_fallthru
        _
    $region6: #{tpu_custom_call.1} parent=1 // loop_footer
      %s20 = sadd.s32 1, %s16
    $region7: #{tpu_custom_call.1} parent=1 // loop_footer_branch
      %15 = sbr.rel target = $region3
    $region8: #{tpu_custom_call.1} parent=1 // loop_exit
      _
    %373 = vsyncpa [#allocation3], 1
    %s374 = scalar_lea.sflag [#allocation3], 1
    %375 = vsyncpa %s374, 1
    %376 = vsyncpa [#allocation4], 1
    %s377 = scalar_lea.sflag [#allocation4], 1
    %378 = vsyncpa %s377, 1

</llo_original>
